<compile_context>
chip_gen: v5e
topology: v5e:2x2
jax: 0.10.0
libtpu: 0.0.40
codegen_flags: <defaults>
</compile_context>

<pallas_src>
import functools

import jax
import jax.numpy as jnp
import numpy as np
from jax.experimental import pallas as pl
from jax.experimental.pallas import tpu as pltpu

LANE = 128      # lane width (f32 / bf16)
SUBLANE = 8     # f32 sublane width


def _rup(n, m):
    return ((n + m - 1) // m) * m


def _pad2d(a, rows, cols, dtype):
    out = jnp.zeros((rows, cols), dtype)
    return out.at[: a.shape[0], : a.shape[1]].set(a.astype(dtype))


# ----------------------------------------------------------------------------- kernel
def _multi_vae_kernel(*refs, n_enc, n_dec, z_pad, gen_pad, mxu_dtype):
    it = iter(refs)
    xin_ref = next(it)
    enc = [(next(it), next(it)) for _ in range(n_enc)]
    zw_ref, zb_ref = next(it), next(it)
    eps_ref = next(it)
    lab_ref = next(it)
    dec = [(next(it), next(it)) for _ in range(n_dec)]
    gw_ref, gb_ref = next(it), next(it)
    out_gen_ref = next(it)
    out_lat_ref = next(it)

    def dense(a_f32, w_ref, b_ref):
        # bf16 MXU operands, f32 accumulation, f32 bias.
        acc = jnp.dot(a_f32.astype(mxu_dtype), w_ref[...],
                      preferred_element_type=jnp.float32)
        return acc + b_ref[...]

    # ------------- encoder MLP (tanh; dropout_p == 0 -> identity) -------------
    h = xin_ref[...]
    for w_ref, b_ref in enc:
        h = jnp.tanh(dense(h, w_ref, b_ref))

    # ---------- fused z_mean / z_logvar heads + reparameterization ------------
    lat = dense(h, zw_ref, zb_ref)                     # (TM, 2*z_pad)
    out_lat_ref[...] = lat                             # [z_mean_pad | z_logvar_pad]
    z_mean = lat[:, 0:z_pad]
    z_logvar = lat[:, z_pad:2 * z_pad]
    z = z_mean + eps_ref[...] * jnp.exp(0.5 * z_logvar)     # torch.addcmul

    # ------- merged decoder: feats || masks branches stacked along lanes ------
    g = z + lab_ref[...]            # z_cat: label folded into column z_dim
    for w_ref, b_ref in dec:
        g = jnp.tanh(dense(g, w_ref, b_ref))

    heads = dense(g, gw_ref, gb_ref)                   # (TM, 3*gen_pad)
    out_gen_ref[:, 0:2 * gen_pad] = heads[:, 0:2 * gen_pad]
    m_logits = heads[:, 2 * gen_pad:3 * gen_pad]
    # sigmoid via EUP exp + approximate reciprocal (otherwise-idle EUP slot)
    out_gen_ref[:, 2 * gen_pad:3 * gen_pad] = pl.reciprocal(
        1.0 + jnp.exp(-m_logits), approx=True)


# ----------------------------------------------------------------------------- params
def _init_linear(key, fan_in, fan_out):
    """Deterministic synthetic init (PyTorch-style uniform bound), (in,out) layout."""
    kw, kb = jax.random.split(key)
    bound = 1.0 / np.sqrt(fan_in)
    w = jax.random.uniform(kw, (fan_in, fan_out), jnp.float32, -bound, bound)
    b = jax.random.uniform(kb, (1, fan_out), jnp.float32, -bound, bound)
    return w, b


def init_multi_vae_params(key, x_dim, z_dim, seq_len, dense_x_z, dense_z_x):
    y_dim = 1
    keys = iter(jax.random.split(key, 64))
    params = {}

    # encoder mlp_x_z
    enc = []
    in_dim = 2 * x_dim * seq_len + y_dim
    for h in dense_x_z:
        enc.append(_init_linear(next(keys), in_dim, h))
        in_dim = h
    params["mlp_x_z"] = enc
    dim_x_z = dense_x_z[-1]
    params["z_mean"] = _init_linear(next(keys), dim_x_z, z_dim)
    params["z_logvar"] = _init_linear(next(keys), dim_x_z, z_dim)

    # decoder (feats branch)
    dec_f = []
    in_dim = z_dim + y_dim
    for h in dense_z_x:
        dec_f.append(_init_linear(next(keys), in_dim, h))
        in_dim = h
    params["mlp_z_x_feats"] = dec_f
    dim_z_x = dense_z_x[-1]
    params["gen_x_mean_feats"] = _init_linear(next(keys), dim_z_x, x_dim * seq_len)
    params["gen_x_logvar_feats"] = _init_linear(next(keys), dim_z_x, x_dim * seq_len)

    # decoder (masks branch)
    dec_m = []
    in_dim = z_dim + y_dim
    for h in dense_z_x:
        dec_m.append(_init_linear(next(keys), in_dim, h))
        in_dim = h
    params["mlp_z_x_masks"] = dec_m
    params["gen_x_mean_masks"] = _init_linear(next(keys), dim_z_x, x_dim * seq_len)
    return params


def pack_multi_vae_params(params, *, x_dim, z_dim, seq_len, dense_x_z, dense_z_x,
                          mxu_dtype=jnp.bfloat16):
    """Pack raw (in,out) weights into zero-padded, lane-aligned, branch-merged blocks."""
    y_dim = 1
    out_dim = x_dim * seq_len

    # ---- encoder layers ----
    enc_in = 2 * x_dim * seq_len + y_dim
    enc_dims = [enc_in] + list(dense_x_z)
    enc_pads = [_rup(d, LANE) for d in enc_dims]
    enc = []
    for i, (w, b) in enumerate(params["mlp_x_z"]):
        enc.append((_pad2d(w, enc_pads[i], enc_pads[i + 1], mxu_dtype),
                    _pad2d(b, 1, enc_pads[i + 1], jnp.float32)))

    # ---- fused z_mean / z_logvar head -> (hlast_pad, 2*z_pad) ----
    z_pad = _rup(z_dim, LANE)
    # the "fold label into z block" trick needs z_dim+1 to fit the same pad
    assert _rup(z_dim + y_dim, LANE) == z_pad, "z_dim must not be a multiple of 128"
    hlast_p = enc_pads[-1]
    (wzm, bzm), (wzv, bzv) = params["z_mean"], params["z_logvar"]
    zw = jnp.zeros((hlast_p, 2 * z_pad), mxu_dtype)
    zw = zw.at[: wzm.shape[0], 0:z_dim].set(wzm.astype(mxu_dtype))
    zw = zw.at[: wzv.shape[0], z_pad:z_pad + z_dim].set(wzv.astype(mxu_dtype))
    zb = jnp.zeros((1, 2 * z_pad), jnp.float32)
    zb = zb.at[:, 0:z_dim].set(bzm)
    zb = zb.at[:, z_pad:z_pad + z_dim].set(bzv)

    # ---- decoder: merge feats/masks branches along the output (lane) axis ----
    dec_in = z_dim + y_dim
    dec = []
    prev_real = None
    prev_pad = _rup(dec_in, LANE)          # == z_pad (asserted above)
    for i, ((wf, bf), (wm, bm)) in enumerate(zip(params["mlp_z_x_feats"],
                                                 params["mlp_z_x_masks"])):
        h = dense_z_x[i]
        hp = _rup(2 * h, LANE)
        w = jnp.zeros((prev_pad, hp), mxu_dtype)
        b = jnp.zeros((1, hp), jnp.float32)
        if i == 0:
            # both branches read the same z_cat rows
            w = w.at[:dec_in, 0:h].set(wf.astype(mxu_dtype))
            w = w.at[:dec_in, h:2 * h].set(wm.astype(mxu_dtype))
        else:
            hp_prev = prev_real
            w = w.at[0:hp_prev, 0:h].set(wf.astype(mxu_dtype))
            w = w.at[hp_prev:2 * hp_prev, h:2 * h].set(wm.astype(mxu_dtype))
        b = b.at[:, 0:h].set(bf)
        b = b.at[:, h:2 * h].set(bm)
        dec.append((w, b))
        prev_real, prev_pad = h, hp

    # ---- fused generation heads: [mean_feats | logvar_feats | mean_masks] ----
    gen_pad = _rup(out_dim, LANE)
    hlast = dense_z_x[-1]
    (wmf, bmf) = params["gen_x_mean_feats"]
    (wvf, bvf) = params["gen_x_logvar_feats"]
    (wmm, bmm) = params["gen_x_mean_masks"]
    gw = jnp.zeros((prev_pad, 3 * gen_pad), mxu_dtype)
    gb = jnp.zeros((1, 3 * gen_pad), jnp.float32)
    gw = gw.at[0:hlast, 0:out_dim].set(wmf.astype(mxu_dtype))
    gw = gw.at[0:hlast, gen_pad:gen_pad + out_dim].set(wvf.astype(mxu_dtype))
    gw = gw.at[hlast:2 * hlast, 2 * gen_pad:2 * gen_pad + out_dim].set(wmm.astype(mxu_dtype))
    gb = gb.at[:, 0:out_dim].set(bmf)
    gb = gb.at[:, gen_pad:gen_pad + out_dim].set(bvf)
    gb = gb.at[:, 2 * gen_pad:2 * gen_pad + out_dim].set(bmm)

    return dict(enc=enc, zw=zw, zb=zb, dec=dec, gw=gw, gb=gb)


# ----------------------------------------------------------------------------- forward
def multi_vae_forward(packed, x, labels, eps, *, x_dim, seq_len, z_dim,
                      compute_loss=False, beta=1.0):
    """x: (B, 2, x_dim, seq_len)   labels: (B, 1, seq_len)   eps: (B, z_dim)."""
    B = x.shape[0]
    out_dim = x_dim * seq_len

    enc_in_pad = packed["enc"][0][0].shape[0]
    dec_in_pad = packed["dec"][0][0].shape[0]
    z_pad = packed["zw"].shape[1] // 2
    gen_pad = packed["gw"].shape[1] // 3
    mxu_dtype = packed["enc"][0][0].dtype

    TM = _rup(B, SUBLANE) if B <= LANE else LANE   # batch tile (sublane-aligned)
    Mp = _rup(B, TM)

    # ----------- build padded, lane-aligned batch inputs (tiny glue) ----------
    x_feats = x[:, 0]                                        # (B, x_dim, seq_len)
    x_masks = x[:, 1]
    x_flat = jnp.concatenate([x_feats, x_masks], axis=1).reshape(B, -1)
    lab = labels[:, :, 0]                                    # (B, 1)
    xin = jnp.concatenate([x_flat, lab], axis=1)             # (B, 2*x_dim*seq_len+1)

    xin_pad = jnp.zeros((Mp, enc_in_pad), jnp.float32).at[:B, : xin.shape[1]].set(xin)
    eps_pad = jnp.zeros((Mp, z_pad), jnp.float32).at[:B, :z_dim].set(eps)
    lab_pad = jnp.zeros((Mp, dec_in_pad), jnp.float32).at[:B, z_dim:z_dim + 1].set(lab)

    # ----------------------------- fused pallas_call --------------------------
    def batch_spec(width):
        return pl.BlockSpec((TM, width), lambda i: (i, 0))

    def const_spec(arr):
        return pl.BlockSpec(arr.shape, lambda i: (0, 0))     # VMEM-resident weights

    inputs, in_specs = [xin_pad], [batch_spec(enc_in_pad)]
    for w, b in packed["enc"]:
        inputs += [w, b]
        in_specs += [const_spec(w), const_spec(b)]
    inputs += [packed["zw"], packed["zb"], eps_pad, lab_pad]
    in_specs += [const_spec(packed["zw"]), const_spec(packed["zb"]),
                 batch_spec(z_pad), batch_spec(dec_in_pad)]
    for w, b in packed["dec"]:
        inputs += [w, b]
        in_specs += [const_spec(w), const_spec(b)]
    inputs += [packed["gw"], packed["gb"]]
    in_specs += [const_spec(packed["gw"]), const_spec(packed["gb"])]

    out_gen, out_lat = pl.pallas_call(
        functools.partial(_multi_vae_kernel,
                          n_enc=len(packed["enc"]), n_dec=len(packed["dec"]),
                          z_pad=z_pad, gen_pad=gen_pad, mxu_dtype=mxu_dtype),
        grid=(Mp // TM,),
        in_specs=in_specs,
        out_specs=[pl.BlockSpec((TM, 3 * gen_pad), lambda i: (i, 0)),
                   pl.BlockSpec((TM, 2 * z_pad), lambda i: (i, 0))],
        out_shape=(jax.ShapeDtypeStruct((Mp, 3 * gen_pad), jnp.float32),
                   jax.ShapeDtypeStruct((Mp, 2 * z_pad), jnp.float32)),
        compiler_params=pltpu.CompilerParams(
            dimension_semantics=("parallel",)),        # v7x: shard batch over 2 TCs
    )(*inputs)

    # ------------------------------- unpad / reshape --------------------------
    x_hat_feats_mean = out_gen[:B, 0:out_dim].reshape(B, x_dim, seq_len)
    x_hat_feats_logvar = out_gen[:B, gen_pad:gen_pad + out_dim].reshape(B, x_dim, seq_len)
    x_hat_masks_mean = out_gen[:B, 2 * gen_pad:2 * gen_pad + out_dim].reshape(B, x_dim, seq_len)
    z_mean = out_lat[:B, 0:z_dim]
    z_logvar = out_lat[:B, z_pad:z_pad + z_dim]

    losses = None
    if compute_loss:
        # plain-JAX reductions mirroring get_loss() (tiny, not hot-path)
        const_log_pdf = -0.5 * np.log(2.0 * np.pi)
        lr_feats = (-const_log_pdf + 0.5 * x_hat_feats_logvar
                    + jnp.square(x_feats - x_hat_feats_mean)
                    / (2.0 * jnp.exp(x_hat_feats_logvar)))
        lr_feats = jnp.sum(jnp.where(x_masks != 0, lr_feats, 0.0)) / B
        c = 1e-6
        xm = jnp.clip(x_hat_masks_mean, c, 1.0 - c)
        lr_masks = -(x_masks * jnp.log(xm) + (1.0 - x_masks) * jnp.log(1.0 - xm))
        lr_masks = jnp.sum(lr_masks) / B
        loss_recon = lr_feats + lr_masks
        loss_kld = -0.5 * jnp.sum(z_logvar - jnp.exp(z_logvar)
                                  - jnp.square(z_mean) + 1.0) / B
        losses = (loss_recon + beta * loss_kld, loss_recon, loss_kld)

    x_hat = jnp.stack([x_hat_feats_mean, x_hat_masks_mean], axis=1)  # (B,2,x_dim,seq_len)
    return x_hat, losses


# ----------------------------------------------------------------------------- main
if __name__ == "__main__":
    B, x_dim, seq_len, z_dim = 2, 4, 8, 16
    dense_x_z = [32, 32]
    dense_z_x = [32, 32]

    root = jax.random.PRNGKey(0)
    k_params, k_x, k_mask, k_lab, k_eps = jax.random.split(root, 5)

    raw_params = init_multi_vae_params(k_params, x_dim, z_dim, seq_len,
                                       dense_x_z, dense_z_x)
    packed = pack_multi_vae_params(raw_params, x_dim=x_dim, z_dim=z_dim,
                                   seq_len=seq_len, dense_x_z=dense_x_z,
                                   dense_z_x=dense_z_x, mxu_dtype=jnp.bfloat16)

    x = jax.random.normal(k_x, (B, 2, x_dim, seq_len), jnp.float32)
    # second channel is a mask-like channel; make it 0/1 as in the data model
    mask = (jax.random.uniform(k_mask, (B, x_dim, seq_len)) > 0.5).astype(jnp.float32)
    x = x.at[:, 1].set(mask)
    labels = (jax.random.uniform(k_lab, (B, 1, seq_len)) > 0.5).astype(jnp.float32)
    eps = jax.random.normal(k_eps, (B, z_dim), jnp.float32)

    fwd = jax.jit(functools.partial(multi_vae_forward, x_dim=x_dim, seq_len=seq_len,
                                    z_dim=z_dim, compute_loss=True, beta=1.0))
    x_hat, losses = fwd(packed, x, labels, eps)
    x_hat = jax.block_until_ready(x_hat)
    _ = jax.block_until_ready(losses)

    assert x_hat.shape == (B, 2, x_dim, seq_len)
    assert bool(jnp.all(jnp.isfinite(x_hat)))
    assert all(bool(jnp.isfinite(l)) for l in losses)
    print("KERNEL_OK")
</pallas_src>

<mosaic_0001>
module attributes {stable_mosaic.version = 11 : i64} {
  func.func @_multi_vae_kernel(%arg0: i32, %arg1: memref<8x128xf32, #tpu.memory_space<vmem>>, %arg2: memref<128x128xbf16, #tpu.memory_space<vmem>>, %arg3: memref<1x128xf32, #tpu.memory_space<vmem>>, %arg4: memref<128x128xbf16, #tpu.memory_space<vmem>>, %arg5: memref<1x128xf32, #tpu.memory_space<vmem>>, %arg6: memref<128x256xbf16, #tpu.memory_space<vmem>>, %arg7: memref<1x256xf32, #tpu.memory_space<vmem>>, %arg8: memref<8x128xf32, #tpu.memory_space<vmem>>, %arg9: memref<8x128xf32, #tpu.memory_space<vmem>>, %arg10: memref<128x128xbf16, #tpu.memory_space<vmem>>, %arg11: memref<1x128xf32, #tpu.memory_space<vmem>>, %arg12: memref<128x128xbf16, #tpu.memory_space<vmem>>, %arg13: memref<1x128xf32, #tpu.memory_space<vmem>>, %arg14: memref<128x384xbf16, #tpu.memory_space<vmem>>, %arg15: memref<1x384xf32, #tpu.memory_space<vmem>>, %arg16: memref<8x384xf32, #tpu.memory_space<vmem>>, %arg17: memref<8x256xf32, #tpu.memory_space<vmem>>) attributes {dimension_semantics = [#tpu.dimension_semantics<parallel>], iteration_bounds = array<i64: 1>, scalar_prefetch = 0 : i64, scratch_operands = 0 : i64, tpu.core_type = #tpu.core_type<tc>, window_params = [{transform_indices = @transform_0, window_bounds = array<i64: 8, 128>}, {pipeline_mode = #tpu.pipeline_mode<synchronous>, transform_indices = @transform_1, window_bounds = array<i64: 128, 128>}, {pipeline_mode = #tpu.pipeline_mode<synchronous>, transform_indices = @transform_2, window_bounds = array<i64: 1, 128>}, {pipeline_mode = #tpu.pipeline_mode<synchronous>, transform_indices = @transform_3, window_bounds = array<i64: 128, 128>}, {pipeline_mode = #tpu.pipeline_mode<synchronous>, transform_indices = @transform_4, window_bounds = array<i64: 1, 128>}, {pipeline_mode = #tpu.pipeline_mode<synchronous>, transform_indices = @transform_5, window_bounds = array<i64: 128, 256>}, {pipeline_mode = #tpu.pipeline_mode<synchronous>, transform_indices = @transform_6, window_bounds = array<i64: 1, 256>}, {transform_indices = @transform_7, window_bounds = array<i64: 8, 128>}, {transform_indices = @transform_8, window_bounds = array<i64: 8, 128>}, {pipeline_mode = #tpu.pipeline_mode<synchronous>, transform_indices = @transform_9, window_bounds = array<i64: 128, 128>}, {pipeline_mode = #tpu.pipeline_mode<synchronous>, transform_indices = @transform_10, window_bounds = array<i64: 1, 128>}, {pipeline_mode = #tpu.pipeline_mode<synchronous>, transform_indices = @transform_11, window_bounds = array<i64: 128, 128>}, {pipeline_mode = #tpu.pipeline_mode<synchronous>, transform_indices = @transform_12, window_bounds = array<i64: 1, 128>}, {pipeline_mode = #tpu.pipeline_mode<synchronous>, transform_indices = @transform_13, window_bounds = array<i64: 128, 384>}, {pipeline_mode = #tpu.pipeline_mode<synchronous>, transform_indices = @transform_14, window_bounds = array<i64: 1, 384>}, {transform_indices = @transform_15, window_bounds = array<i64: 8, 384>}, {transform_indices = @transform_16, window_bounds = array<i64: 8, 256>}]} {
    %c0 = arith.constant 0 : index
    %c0_0 = arith.constant 0 : index
    %0 = vector.load %arg1[%c0, %c0_0] : memref<8x128xf32, #tpu.memory_space<vmem>>, vector<8x128xf32>
    %1 = arith.truncf %0 : vector<8x128xf32> to vector<8x128xbf16>
    %c0_1 = arith.constant 0 : index
    %c0_2 = arith.constant 0 : index
    %2 = vector.load %arg2[%c0_1, %c0_2] : memref<128x128xbf16, #tpu.memory_space<vmem>>, vector<128x128xbf16>
    %cst = arith.constant dense<0.000000e+00> : vector<8x128xf32>
    %3 = tpu.matmul %1, %2, %cst {dimension_numbers = #tpu.dot_dimension_numbers<[1], [0], [0], [1], [0, 0, 1, 1], [], []>} : vector<8x128xbf16>, vector<128x128xbf16>, vector<8x128xf32> -> vector<8x128xf32>
    %c0_3 = arith.constant 0 : index
    %c0_4 = arith.constant 0 : index
    %4 = vector.load %arg3[%c0_3, %c0_4] : memref<1x128xf32, #tpu.memory_space<vmem>>, vector<1x128xf32>
    %5 = vector.broadcast %4 : vector<1x128xf32> to vector<8x128xf32>
    %6 = arith.addf %3, %5 : vector<8x128xf32>
    %7 = math.tanh %6 : vector<8x128xf32>
    %8 = arith.truncf %7 : vector<8x128xf32> to vector<8x128xbf16>
    %c0_5 = arith.constant 0 : index
    %c0_6 = arith.constant 0 : index
    %9 = vector.load %arg4[%c0_5, %c0_6] : memref<128x128xbf16, #tpu.memory_space<vmem>>, vector<128x128xbf16>
    %cst_7 = arith.constant dense<0.000000e+00> : vector<8x128xf32>
    %10 = tpu.matmul %8, %9, %cst_7 {dimension_numbers = #tpu.dot_dimension_numbers<[1], [0], [0], [1], [0, 0, 1, 1], [], []>} : vector<8x128xbf16>, vector<128x128xbf16>, vector<8x128xf32> -> vector<8x128xf32>
    %c0_8 = arith.constant 0 : index
    %c0_9 = arith.constant 0 : index
    %11 = vector.load %arg5[%c0_8, %c0_9] : memref<1x128xf32, #tpu.memory_space<vmem>>, vector<1x128xf32>
    %12 = vector.broadcast %11 : vector<1x128xf32> to vector<8x128xf32>
    %13 = arith.addf %10, %12 : vector<8x128xf32>
    %14 = math.tanh %13 : vector<8x128xf32>
    %15 = arith.truncf %14 : vector<8x128xf32> to vector<8x128xbf16>
    %c0_10 = arith.constant 0 : index
    %c0_11 = arith.constant 0 : index
    %16 = vector.load %arg6[%c0_10, %c0_11] : memref<128x256xbf16, #tpu.memory_space<vmem>>, vector<128x256xbf16>
    %cst_12 = arith.constant dense<0.000000e+00> : vector<8x256xf32>
    %17 = tpu.matmul %15, %16, %cst_12 {dimension_numbers = #tpu.dot_dimension_numbers<[1], [0], [0], [1], [0, 0, 1, 1], [], []>} : vector<8x128xbf16>, vector<128x256xbf16>, vector<8x256xf32> -> vector<8x256xf32>
    %c0_13 = arith.constant 0 : index
    %c0_14 = arith.constant 0 : index
    %18 = vector.load %arg7[%c0_13, %c0_14] : memref<1x256xf32, #tpu.memory_space<vmem>>, vector<1x256xf32>
    %19 = vector.broadcast %18 : vector<1x256xf32> to vector<8x256xf32>
    %20 = arith.addf %17, %19 : vector<8x256xf32>
    %c0_15 = arith.constant 0 : index
    %c0_16 = arith.constant 0 : index
    %21 = vector.load %arg17[%c0_15, %c0_16] : memref<8x256xf32, #tpu.memory_space<vmem>>, vector<8x256xf32>
    tpu.vector_store %arg17[%c0_15, %c0_16], %20 {strides = array<i32>} : memref<8x256xf32, #tpu.memory_space<vmem>>, vector<8x256xf32>,
    %22 = vector.extract_strided_slice %20 {offsets = [0, 0], sizes = [8, 128], strides = [1, 1]} : vector<8x256xf32> to vector<8x128xf32>
    %23 = vector.extract_strided_slice %20 {offsets = [0, 128], sizes = [8, 128], strides = [1, 1]} : vector<8x256xf32> to vector<8x128xf32>
    %c0_17 = arith.constant 0 : index
    %c0_18 = arith.constant 0 : index
    %24 = vector.load %arg8[%c0_17, %c0_18] : memref<8x128xf32, #tpu.memory_space<vmem>>, vector<8x128xf32>
    %cst_19 = arith.constant 5.000000e-01 : f32
    %25 = vector.broadcast %cst_19 : f32 to vector<8x128xf32>
    %26 = arith.mulf %25, %23 : vector<8x128xf32>
    %27 = math.exp %26 : vector<8x128xf32>
    %28 = arith.mulf %24, %27 : vector<8x128xf32>
    %29 = arith.addf %22, %28 : vector<8x128xf32>
    %c0_20 = arith.constant 0 : index
    %c0_21 = arith.constant 0 : index
    %30 = vector.load %arg9[%c0_20, %c0_21] : memref<8x128xf32, #tpu.memory_space<vmem>>, vector<8x128xf32>
    %31 = arith.addf %29, %30 : vector<8x128xf32>
    %32 = arith.truncf %31 : vector<8x128xf32> to vector<8x128xbf16>
    %c0_22 = arith.constant 0 : index
    %c0_23 = arith.constant 0 : index
    %33 = vector.load %arg10[%c0_22, %c0_23] : memref<128x128xbf16, #tpu.memory_space<vmem>>, vector<128x128xbf16>
    %cst_24 = arith.constant dense<0.000000e+00> : vector<8x128xf32>
    %34 = tpu.matmul %32, %33, %cst_24 {dimension_numbers = #tpu.dot_dimension_numbers<[1], [0], [0], [1], [0, 0, 1, 1], [], []>} : vector<8x128xbf16>, vector<128x128xbf16>, vector<8x128xf32> -> vector<8x128xf32>
    %c0_25 = arith.constant 0 : index
    %c0_26 = arith.constant 0 : index
    %35 = vector.load %arg11[%c0_25, %c0_26] : memref<1x128xf32, #tpu.memory_space<vmem>>, vector<1x128xf32>
    %36 = vector.broadcast %35 : vector<1x128xf32> to vector<8x128xf32>
    %37 = arith.addf %34, %36 : vector<8x128xf32>
    %38 = math.tanh %37 : vector<8x128xf32>
    %39 = arith.truncf %38 : vector<8x128xf32> to vector<8x128xbf16>
    %c0_27 = arith.constant 0 : index
    %c0_28 = arith.constant 0 : index
    %40 = vector.load %arg12[%c0_27, %c0_28] : memref<128x128xbf16, #tpu.memory_space<vmem>>, vector<128x128xbf16>
    %cst_29 = arith.constant dense<0.000000e+00> : vector<8x128xf32>
    %41 = tpu.matmul %39, %40, %cst_29 {dimension_numbers = #tpu.dot_dimension_numbers<[1], [0], [0], [1], [0, 0, 1, 1], [], []>} : vector<8x128xbf16>, vector<128x128xbf16>, vector<8x128xf32> -> vector<8x128xf32>
    %c0_30 = arith.constant 0 : index
    %c0_31 = arith.constant 0 : index
    %42 = vector.load %arg13[%c0_30, %c0_31] : memref<1x128xf32, #tpu.memory_space<vmem>>, vector<1x128xf32>
    %43 = vector.broadcast %42 : vector<1x128xf32> to vector<8x128xf32>
    %44 = arith.addf %41, %43 : vector<8x128xf32>
    %45 = math.tanh %44 : vector<8x128xf32>
    %46 = arith.truncf %45 : vector<8x128xf32> to vector<8x128xbf16>
    %c0_32 = arith.constant 0 : index
    %c0_33 = arith.constant 0 : index
    %47 = vector.load %arg14[%c0_32, %c0_33] : memref<128x384xbf16, #tpu.memory_space<vmem>>, vector<128x384xbf16>
    %cst_34 = arith.constant dense<0.000000e+00> : vector<8x384xf32>
    %48 = tpu.matmul %46, %47, %cst_34 {dimension_numbers = #tpu.dot_dimension_numbers<[1], [0], [0], [1], [0, 0, 1, 1], [], []>} : vector<8x128xbf16>, vector<128x384xbf16>, vector<8x384xf32> -> vector<8x384xf32>
    %c0_35 = arith.constant 0 : index
    %c0_36 = arith.constant 0 : index
    %49 = vector.load %arg15[%c0_35, %c0_36] : memref<1x384xf32, #tpu.memory_space<vmem>>, vector<1x384xf32>
    %50 = vector.broadcast %49 : vector<1x384xf32> to vector<8x384xf32>
    %51 = arith.addf %48, %50 : vector<8x384xf32>
    %52 = vector.extract_strided_slice %51 {offsets = [0, 0], sizes = [8, 256], strides = [1, 1]} : vector<8x384xf32> to vector<8x256xf32>
    %c0_37 = arith.constant 0 : index
    %c0_38 = arith.constant 0 : index
    %53 = vector.load %arg16[%c0_37, %c0_38] : memref<8x384xf32, #tpu.memory_space<vmem>>, vector<8x256xf32>
    tpu.vector_store %arg16[%c0_37, %c0_38], %52 {strides = array<i32>} : memref<8x384xf32, #tpu.memory_space<vmem>>, vector<8x256xf32>,
    %54 = vector.extract_strided_slice %51 {offsets = [0, 256], sizes = [8, 128], strides = [1, 1]} : vector<8x384xf32> to vector<8x128xf32>
    %cst_39 = arith.constant 0.000000e+00 : f32
    %55 = vector.broadcast %cst_39 : f32 to vector<8x128xf32>
    %56 = arith.subf %55, %54 : vector<8x128xf32>
    %57 = math.exp %56 : vector<8x128xf32>
    %cst_40 = arith.constant 1.000000e+00 : f32
    %58 = vector.broadcast %cst_40 : f32 to vector<8x128xf32>
    %59 = arith.addf %58, %57 : vector<8x128xf32>
    %60 = tpu.reciprocal %59 {approx = true} : vector<8x128xf32> -> vector<8x128xf32>
    %c0_41 = arith.constant 0 : index
    %c256 = arith.constant 256 : index
    %61 = vector.load %arg16[%c0_41, %c256] : memref<8x384xf32, #tpu.memory_space<vmem>>, vector<8x128xf32>
    tpu.vector_store %arg16[%c0_41, %c256], %60 {strides = array<i32>} : memref<8x384xf32, #tpu.memory_space<vmem>>, vector<8x128xf32>,
    return
  }
  func.func @transform_0(%arg0: i32) -> (i32, i32) {
    %c0_i32 = arith.constant 0 : i32
    %c0_i32_0 = arith.constant 0 : i32
    return %arg0, %c0_i32 : i32, i32
  }
  func.func @transform_1(%arg0: i32) -> (i32, i32) {
    %c0_i32 = arith.constant 0 : i32
    %c0_i32_0 = arith.constant 0 : i32
    %c0_i32_1 = arith.constant 0 : i32
    return %c0_i32, %c0_i32_0 : i32, i32
  }
  func.func @transform_2(%arg0: i32) -> (i32, i32) {
    %c0_i32 = arith.constant 0 : i32
    %c0_i32_0 = arith.constant 0 : i32
    %c0_i32_1 = arith.constant 0 : i32
    return %c0_i32, %c0_i32_0 : i32, i32
  }
  func.func @transform_3(%arg0: i32) -> (i32, i32) {
    %c0_i32 = arith.constant 0 : i32
    %c0_i32_0 = arith.constant 0 : i32
    %c0_i32_1 = arith.constant 0 : i32
    return %c0_i32, %c0_i32_0 : i32, i32
  }
  func.func @transform_4(%arg0: i32) -> (i32, i32) {
    %c0_i32 = arith.constant 0 : i32
    %c0_i32_0 = arith.constant 0 : i32
    %c0_i32_1 = arith.constant 0 : i32
    return %c0_i32, %c0_i32_0 : i32, i32
  }
  func.func @transform_5(%arg0: i32) -> (i32, i32) {
    %c0_i32 = arith.constant 0 : i32
    %c0_i32_0 = arith.constant 0 : i32
    %c0_i32_1 = arith.constant 0 : i32
    return %c0_i32, %c0_i32_0 : i32, i32
  }
  func.func @transform_6(%arg0: i32) -> (i32, i32) {
    %c0_i32 = arith.constant 0 : i32
    %c0_i32_0 = arith.constant 0 : i32
    %c0_i32_1 = arith.constant 0 : i32
    return %c0_i32, %c0_i32_0 : i32, i32
  }
  func.func @transform_7(%arg0: i32) -> (i32, i32) {
    %c0_i32 = arith.constant 0 : i32
    %c0_i32_0 = arith.constant 0 : i32
    return %arg0, %c0_i32 : i32, i32
  }
  func.func @transform_8(%arg0: i32) -> (i32, i32) {
    %c0_i32 = arith.constant 0 : i32
    %c0_i32_0 = arith.constant 0 : i32
    return %arg0, %c0_i32 : i32, i32
  }
  func.func @transform_9(%arg0: i32) -> (i32, i32) {
    %c0_i32 = arith.constant 0 : i32
    %c0_i32_0 = arith.constant 0 : i32
    %c0_i32_1 = arith.constant 0 : i32
    return %c0_i32, %c0_i32_0 : i32, i32
  }
  func.func @transform_10(%arg0: i32) -> (i32, i32) {
    %c0_i32 = arith.constant 0 : i32
    %c0_i32_0 = arith.constant 0 : i32
    %c0_i32_1 = arith.constant 0 : i32
    return %c0_i32, %c0_i32_0 : i32, i32
  }
  func.func @transform_11(%arg0: i32) -> (i32, i32) {
    %c0_i32 = arith.constant 0 : i32
    %c0_i32_0 = arith.constant 0 : i32
    %c0_i32_1 = arith.constant 0 : i32
    return %c0_i32, %c0_i32_0 : i32, i32
  }
  func.func @transform_12(%arg0: i32) -> (i32, i32) {
    %c0_i32 = arith.constant 0 : i32
    %c0_i32_0 = arith.constant 0 : i32
    %c0_i32_1 = arith.constant 0 : i32
    return %c0_i32, %c0_i32_0 : i32, i32
  }
  func.func @transform_13(%arg0: i32) -> (i32, i32) {
    %c0_i32 = arith.constant 0 : i32
    %c0_i32_0 = arith.constant 0 : i32
    %c0_i32_1 = arith.constant 0 : i32
    return %c0_i32, %c0_i32_0 : i32, i32
  }
  func.func @transform_14(%arg0: i32) -> (i32, i32) {
    %c0_i32 = arith.constant 0 : i32
    %c0_i32_0 = arith.constant 0 : i32
    %c0_i32_1 = arith.constant 0 : i32
    return %c0_i32, %c0_i32_0 : i32, i32
  }
  func.func @transform_15(%arg0: i32) -> (i32, i32) {
    %c0_i32 = arith.constant 0 : i32
    %c0_i32_0 = arith.constant 0 : i32
    return %arg0, %c0_i32 : i32, i32
  }
  func.func @transform_16(%arg0: i32) -> (i32, i32) {
    %c0_i32 = arith.constant 0 : i32
    %c0_i32_0 = arith.constant 0 : i32
    return %arg0, %c0_i32 : i32, i32
  }
}

</mosaic_0001>

<llo_original>
// kernel: multi_vae_forward.1
$region0: #{multi_vae_forward.1}
  #allocation0 [shape = 'u32[]', space=smem, size = 0x4, offset = 0x4, fixed_abs, tag = 'smem constant byte address 0x4 - core index']
  #allocation1 [shape = 'u32[72,128]{1,0:T(1,128)}', space=vmem, size = 0x9000, scoped, tag = 'internal scratch']
  %s0 = inlined_call_operand.vmem [shape: f32[8,128], index: 0, kind: input, shape index: {}]
  %s1 = inlined_call_operand.vmem [shape: bf16[128,128], index: 1, kind: input, shape index: {}]
  %s2 = inlined_call_operand.vmem [shape: f32[1,128], index: 2, kind: input, shape index: {}]
  %s3 = inlined_call_operand.hbm [shape: bf16[128,128], index: 3, kind: input, shape index: {}]
  %s4 = inlined_call_operand.vmem [shape: f32[1,128], index: 4, kind: input, shape index: {}]
  %s5 = inlined_call_operand.hbm [shape: bf16[128,256], index: 5, kind: input, shape index: {}]
  %s6 = inlined_call_operand.vmem [shape: f32[1,256], index: 6, kind: input, shape index: {}]
  %s7 = inlined_call_operand.vmem [shape: f32[8,128], index: 7, kind: input, shape index: {}]
  %s8 = inlined_call_operand.vmem [shape: f32[8,128], index: 8, kind: input, shape index: {}]
  %s9 = inlined_call_operand.hbm [shape: bf16[128,128], index: 9, kind: input, shape index: {}]
  %s10 = inlined_call_operand.vmem [shape: f32[1,128], index: 10, kind: input, shape index: {}]
  %s11 = inlined_call_operand.hbm [shape: bf16[128,128], index: 11, kind: input, shape index: {}]
  %s12 = inlined_call_operand.vmem [shape: f32[1,128], index: 12, kind: input, shape index: {}]
  %s13 = inlined_call_operand.hbm [shape: bf16[128,384], index: 13, kind: input, shape index: {}]
  %s14 = inlined_call_operand.vmem [shape: f32[1,384], index: 14, kind: input, shape index: {}]
  %s15 = inlined_call_operand.vmem [shape: f32[8,384], index: 15, kind: output, shape index: {0}]
  %s16 = inlined_call_operand.vmem [shape: f32[8,256], index: 16, kind: output, shape index: {1}]
  %17 = xla_tuple %s15, %s16
  %s18 = sld [smem:[#allocation0]]
  $region98: #{multi_vae_forward.1} parent=0
    _
  %s20 = ssub.s32 1, %s18
  %s21 = scalar_select 0, %s20, %s18
  $region1: #{multi_vae_forward.1} parent=0
    #allocation2 [shape = 'u8[32768]{0}', space=vmem, size = 0x8000, scoped, tag = 'input window, operand 3, single buffered']
    #allocation3 [shape = 's32[1]{0}', space=sflag, size = 0x4, scoped, tag = 'scoped memory for multi_vae_forward.1']
    #allocation4 [shape = 'u8[65536]{0}', space=vmem, size = 0x10000, scoped, tag = 'input window, operand 5, single buffered']
    #allocation5 [shape = 's32[1]{0}', space=sflag, size = 0x4, scoped, tag = 'scoped memory for multi_vae_forward.1']
    #allocation6 [shape = 'u8[32768]{0}', space=vmem, size = 0x8000, scoped, tag = 'input window, operand 9, single buffered']
    #allocation7 [shape = 'u8[32768]{0}', space=vmem, size = 0x8000, scoped, tag = 'input window, operand 11, single buffered']
    #allocation8 [shape = 's32[1]{0}', space=sflag, size = 0x4, scoped, tag = 'scoped memory for multi_vae_forward.1']
    #allocation9 [shape = 'u8[98304]{0}', space=vmem, size = 0x18000, scoped, tag = 'input window, operand 13, single buffered']
    %22 = vsyncpa [#allocation3], 0
    %23 = vsyncpa [#allocation5], 0
    %24 = vsyncpa [#allocation8], 0
    // Predicated region
    $region2: #{multi_vae_forward.1} parent=1 // pred_check
      _
    $region3: #{multi_vae_forward.1} parent=1 // pred_check_branch
      %26 = sbr.rel (0) target = $region5
    $region4: #{multi_vae_forward.1} parent=1 // pred_region
      _
    $region5: #{multi_vae_forward.1} parent=1 // pred_fallthru
      _
    // Predicated region
    $region6: #{multi_vae_forward.1} parent=1 // pred_check
      _
    $region7: #{multi_vae_forward.1} parent=1 // pred_check_branch
      %28 = sbr.rel (0) target = $region9
    $region8: #{multi_vae_forward.1} parent=1 // pred_region
      _
    $region9: #{multi_vae_forward.1} parent=1 // pred_fallthru
      _
    // Predicated region
    $region10: #{multi_vae_forward.1} parent=1 // pred_check
      _
    $region11: #{multi_vae_forward.1} parent=1 // pred_check_branch
      %30 = sbr.rel (0) target = $region13
    $region12: #{multi_vae_forward.1} parent=1 // pred_region
      _
    $region13: #{multi_vae_forward.1} parent=1 // pred_fallthru
      _
    // Predicated region
    $region14: #{multi_vae_forward.1} parent=1 // pred_check
      _
    $region15: #{multi_vae_forward.1} parent=1 // pred_check_branch
      %32 = sbr.rel (0) target = $region17
    $region16: #{multi_vae_forward.1} parent=1 // pred_region
      %34 = vsyncadd [#allocation3], 0
      %s35 = sshll.u32 %s3, 4
      %s36 = int_to_ptr.hbm [resolvable:$true] %s35
      %s37 = sshll.u32 [#allocation2], 4
      %s38 = int_to_ptr.vmem [resolvable:$true] %s37
      %43 = dma.hbm_to_vmem [thread:$0]  %s36, 1024, %s38, [#allocation3], 64, 64, 4
    $region17: #{multi_vae_forward.1} parent=1 // pred_fallthru
      _
    // Predicated region
    $region18: #{multi_vae_forward.1} parent=1 // pred_check
      _
    $region19: #{multi_vae_forward.1} parent=1 // pred_check_branch
      %45 = sbr.rel (0) target = $region21
    $region20: #{multi_vae_forward.1} parent=1 // pred_region
      _
    $region21: #{multi_vae_forward.1} parent=1 // pred_fallthru
      _
    // Predicated region
    $region22: #{multi_vae_forward.1} parent=1 // pred_check
      _
    $region23: #{multi_vae_forward.1} parent=1 // pred_check_branch
      %47 = sbr.rel (0) target = $region25
    $region24: #{multi_vae_forward.1} parent=1 // pred_region
      %49 = vsyncadd [#allocation5], 0
      %s50 = sshll.u32 %s5, 4
      %s51 = int_to_ptr.hbm [resolvable:$true] %s50
      %s52 = sshll.u32 [#allocation4], 4
      %s53 = int_to_ptr.vmem [resolvable:$true] %s52
      %58 = dma.hbm_to_vmem [thread:$0]  %s51, 2048, %s53, [#allocation5], 128, 128, 8
    $region25: #{multi_vae_forward.1} parent=1 // pred_fallthru
      _
    // Predicated region
    $region26: #{multi_vae_forward.1} parent=1 // pred_check
      _
    $region27: #{multi_vae_forward.1} parent=1 // pred_check_branch
      %60 = sbr.rel (0) target = $region29
    $region28: #{multi_vae_forward.1} parent=1 // pred_region
      _
    $region29: #{multi_vae_forward.1} parent=1 // pred_fallthru
      _
    // Predicated region
    $region30: #{multi_vae_forward.1} parent=1 // pred_check
      _
    $region31: #{multi_vae_forward.1} parent=1 // pred_check_branch
      %62 = sbr.rel (0) target = $region33
    $region32: #{multi_vae_forward.1} parent=1 // pred_region
      _
    $region33: #{multi_vae_forward.1} parent=1 // pred_fallthru
      _
    // Predicated region
    $region34: #{multi_vae_forward.1} parent=1 // pred_check
      _
    $region35: #{multi_vae_forward.1} parent=1 // pred_check_branch
      %64 = sbr.rel (0) target = $region37
    $region36: #{multi_vae_forward.1} parent=1 // pred_region
      _
    $region37: #{multi_vae_forward.1} parent=1 // pred_fallthru
      _
    // Predicated region
    $region38: #{multi_vae_forward.1} parent=1 // pred_check
      _
    $region39: #{multi_vae_forward.1} parent=1 // pred_check_branch
      %66 = sbr.rel (0) target = $region41
    $region40: #{multi_vae_forward.1} parent=1 // pred_region
      %68 = vsyncadd [#allocation5], 0
      %s69 = sshll.u32 %s9, 4
      %s70 = int_to_ptr.hbm [resolvable:$true] %s69
      %s71 = sshll.u32 [#allocation6], 4
      %s72 = int_to_ptr.vmem [resolvable:$true] %s71
      %77 = dma.hbm_to_vmem [thread:$0]  %s70, 1024, %s72, [#allocation5], 64, 64, 4
    $region41: #{multi_vae_forward.1} parent=1 // pred_fallthru
      _
    // Predicated region
    $region42: #{multi_vae_forward.1} parent=1 // pred_check
      _
    $region43: #{multi_vae_forward.1} parent=1 // pred_check_branch
      %79 = sbr.rel (0) target = $region45
    $region44: #{multi_vae_forward.1} parent=1 // pred_region
      _
    $region45: #{multi_vae_forward.1} parent=1 // pred_fallthru
      _
    // Predicated region
    $region46: #{multi_vae_forward.1} parent=1 // pred_check
      _
    $region47: #{multi_vae_forward.1} parent=1 // pred_check_branch
      %81 = sbr.rel (0) target = $region49
    $region48: #{multi_vae_forward.1} parent=1 // pred_region
      %83 = vsyncadd [#allocation8], 0
      %s84 = sshll.u32 %s11, 4
      %s85 = int_to_ptr.hbm [resolvable:$true] %s84
      %s86 = sshll.u32 [#allocation7], 4
      %s87 = int_to_ptr.vmem [resolvable:$true] %s86
      %92 = dma.hbm_to_vmem [thread:$0]  %s85, 1024, %s87, [#allocation8], 64, 64, 4
    $region49: #{multi_vae_forward.1} parent=1 // pred_fallthru
      _
    // Predicated region
    $region50: #{multi_vae_forward.1} parent=1 // pred_check
      _
    $region51: #{multi_vae_forward.1} parent=1 // pred_check_branch
      %94 = sbr.rel (0) target = $region53
    $region52: #{multi_vae_forward.1} parent=1 // pred_region
      _
    $region53: #{multi_vae_forward.1} parent=1 // pred_fallthru
      _
    // Predicated region
    $region54: #{multi_vae_forward.1} parent=1 // pred_check
      _
    $region55: #{multi_vae_forward.1} parent=1 // pred_check_branch
      %96 = sbr.rel (0) target = $region57
    $region56: #{multi_vae_forward.1} parent=1 // pred_region
      %98 = vsyncadd [#allocation8], 0
      %s99 = sshll.u32 %s13, 4
      %s100 = int_to_ptr.hbm [resolvable:$true] %s99
      %s101 = sshll.u32 [#allocation9], 4
      %s102 = int_to_ptr.vmem [resolvable:$true] %s101
      %107 = dma.hbm_to_vmem [thread:$0]  %s100, 3072, %s102, [#allocation8], 192, 192, 12
    $region57: #{multi_vae_forward.1} parent=1 // pred_fallthru
      _
    // Predicated region
    $region58: #{multi_vae_forward.1} parent=1 // pred_check
      _
    $region59: #{multi_vae_forward.1} parent=1 // pred_check_branch
      %109 = sbr.rel (0) target = $region61
    $region60: #{multi_vae_forward.1} parent=1 // pred_region
      _
    $region61: #{multi_vae_forward.1} parent=1 // pred_fallthru
      _
    // Predicated region
    $region62: #{multi_vae_forward.1} parent=1 // pred_check
      _
    $region63: #{multi_vae_forward.1} parent=1 // pred_check_branch
      %111 = sbr.rel (0) target = $region65
    $region64: #{multi_vae_forward.1} parent=1 // pred_region
      %113 = dma.done [#allocation3], 1024
    $region65: #{multi_vae_forward.1} parent=1 // pred_fallthru
      _
    // Predicated region
    $region66: #{multi_vae_forward.1} parent=1 // pred_check
      _
    $region67: #{multi_vae_forward.1} parent=1 // pred_check_branch
      %115 = sbr.rel (0) target = $region69
    $region68: #{multi_vae_forward.1} parent=1 // pred_region
      %117 = dma.done [#allocation5], 2048
    $region69: #{multi_vae_forward.1} parent=1 // pred_fallthru
      _
    // Predicated region
    $region70: #{multi_vae_forward.1} parent=1 // pred_check
      _
    $region71: #{multi_vae_forward.1} parent=1 // pred_check_branch
      %119 = sbr.rel (0) target = $region73
    $region72: #{multi_vae_forward.1} parent=1 // pred_region
      %121 = dma.done [#allocation5], 1024
    $region73: #{multi_vae_forward.1} parent=1 // pred_fallthru
      _
    // Predicated region
    $region74: #{multi_vae_forward.1} parent=1 // pred_check
      _
    $region75: #{multi_vae_forward.1} parent=1 // pred_check_branch
      %123 = sbr.rel (0) target = $region77
    $region76: #{multi_vae_forward.1} parent=1 // pred_region
      %125 = dma.done [#allocation8], 1024
    $region77: #{multi_vae_forward.1} parent=1 // pred_fallthru
      _
    // Predicated region
    $region78: #{multi_vae_forward.1} parent=1 // pred_check
      _
    $region79: #{multi_vae_forward.1} parent=1 // pred_check_branch
      %127 = sbr.rel (0) target = $region81
    $region80: #{multi_vae_forward.1} parent=1 // pred_region
      %129 = dma.done [#allocation8], 3072
    $region81: #{multi_vae_forward.1} parent=1 // pred_fallthru
      _
    %v130 = vld [vmem:[%s0] sm:$0xff]
    %v131 = vpack.c.bf16 %v130, %v130
    %v132 = vld [vmem:[%s1] sm:$0xf]
    %v133 = vld [vmem:[%s1 + $0x4] sm:$0xf]
    %v134 = vld [vmem:[%s1 + $0x8] sm:$0xf]
    %v135 = vld [vmem:[%s1 + $0xc] sm:$0xf]
    %v136 = vld [vmem:[%s1 + $0x10] sm:$0xf]
    %v137 = vld [vmem:[%s1 + $0x14] sm:$0xf]
    %v138 = vld [vmem:[%s1 + $0x18] sm:$0xf]
    %v139 = vld [vmem:[%s1 + $0x1c] sm:$0xf]
    %v140 = vld [vmem:[%s1 + $0x20] sm:$0xf]
    %v141 = vld [vmem:[%s1 + $0x24] sm:$0xf]
    %v142 = vld [vmem:[%s1 + $0x28] sm:$0xf]
    %v143 = vld [vmem:[%s1 + $0x2c] sm:$0xf]
    %v144 = vld [vmem:[%s1 + $0x30] sm:$0xf]
    %v145 = vld [vmem:[%s1 + $0x34] sm:$0xf]
    %v146 = vld [vmem:[%s1 + $0x38] sm:$0xf]
    %v147 = vld [vmem:[%s1 + $0x3c] sm:$0xf]
    %v148 = vld [vmem:[%s2] sm:$0x1]
    %v150 = vperm.slane %v148, 0
    %v168 = vunpack.c.l.b16 %v132
    %v169 = vunpack.c.l.b16 %v133
    %v170 = vunpack.c.l.b16 %v134
    %v171 = vunpack.c.l.b16 %v135
    %v172 = vunpack.c.l.b16 %v136
    %v173 = vunpack.c.l.b16 %v137
    %v174 = vunpack.c.l.b16 %v138
    %v175 = vunpack.c.l.b16 %v139
    %v176 = vunpack.c.l.b16 %v140
    %v177 = vunpack.c.l.b16 %v141
    %v178 = vunpack.c.l.b16 %v142
    %v179 = vunpack.c.l.b16 %v143
    %v180 = vunpack.c.l.b16 %v144
    %v181 = vunpack.c.l.b16 %v145
    %v182 = vunpack.c.l.b16 %v146
    %v183 = vunpack.c.l.b16 %v147
    %v184 = vpack.c.b16 %v169, %v168
    %v185 = vpack.c.b16 %v171, %v170
    %v186 = vpack.c.b16 %v173, %v172
    %v187 = vpack.c.b16 %v175, %v174
    %v188 = vpack.c.b16 %v177, %v176
    %v189 = vpack.c.b16 %v179, %v178
    %v190 = vpack.c.b16 %v181, %v180
    %v191 = vpack.c.b16 %v183, %v182
    %200 = vmatpush.bf16.msra.mxu0 %v191
    %201 = vmatpush.bf16.msra.mxu0 %v190
    %202 = vmatpush.bf16.msra.mxu0 %v189
    %203 = vmatpush.bf16.msra.mxu0 %v188
    %204 = vmatpush.bf16.msra.mxu0 %v187
    %205 = vmatpush.bf16.msra.mxu0 %v186
    %206 = vmatpush.bf16.msra.mxu0 %v185
    %207 = vmatpush.bf16.msra.mxu0 %v184
    %208 = vmatmul.bf16.gmra.mxu0 %v131
    %v209 = vpop.f32.mrf.mxu0
    %v210 = vadd.f32 %v150, %v209
    %v211 = vpop.f32.mrf.mxu0
    %212 = vdwg.mxu0
    %v213 = vtanh.pop %v210
    %v214 = vpack.c.bf16 %v213, %v213
    %v215 = vld [vmem:[#allocation2] sm:$0xf]
    %v216 = vld [vmem:[#allocation2 + $0x4] sm:$0xf]
    %v217 = vld [vmem:[#allocation2 + $0x8] sm:$0xf]
    %v218 = vld [vmem:[#allocation2 + $0xc] sm:$0xf]
    %v219 = vld [vmem:[#allocation2 + $0x10] sm:$0xf]
    %v220 = vld [vmem:[#allocation2 + $0x14] sm:$0xf]
    %v221 = vld [vmem:[#allocation2 + $0x18] sm:$0xf]
    %v222 = vld [vmem:[#allocation2 + $0x1c] sm:$0xf]
    %v223 = vld [vmem:[#allocation2 + $0x20] sm:$0xf]
    %v224 = vld [vmem:[#allocation2 + $0x24] sm:$0xf]
    %v225 = vld [vmem:[#allocation2 + $0x28] sm:$0xf]
    %v226 = vld [vmem:[#allocation2 + $0x2c] sm:$0xf]
    %v227 = vld [vmem:[#allocation2 + $0x30] sm:$0xf]
    %v228 = vld [vmem:[#allocation2 + $0x34] sm:$0xf]
    %v229 = vld [vmem:[#allocation2 + $0x38] sm:$0xf]
    %v230 = vld [vmem:[#allocation2 + $0x3c] sm:$0xf]
    %v231 = vld [vmem:[%s4] sm:$0x1]
    %v233 = vperm.slane %v231, 0
    %v251 = vunpack.c.l.b16 %v215
    %v252 = vunpack.c.l.b16 %v216
    %v253 = vunpack.c.l.b16 %v217
    %v254 = vunpack.c.l.b16 %v218
    %v255 = vunpack.c.l.b16 %v219
    %v256 = vunpack.c.l.b16 %v220
    %v257 = vunpack.c.l.b16 %v221
    %v258 = vunpack.c.l.b16 %v222
    %v259 = vunpack.c.l.b16 %v223
    %v260 = vunpack.c.l.b16 %v224
    %v261 = vunpack.c.l.b16 %v225
    %v262 = vunpack.c.l.b16 %v226
    %v263 = vunpack.c.l.b16 %v227
    %v264 = vunpack.c.l.b16 %v228
    %v265 = vunpack.c.l.b16 %v229
    %v266 = vunpack.c.l.b16 %v230
    %v267 = vpack.c.b16 %v252, %v251
    %v268 = vpack.c.b16 %v254, %v253
    %v269 = vpack.c.b16 %v256, %v255
    %v270 = vpack.c.b16 %v258, %v257
    %v271 = vpack.c.b16 %v260, %v259
    %v272 = vpack.c.b16 %v262, %v261
    %v273 = vpack.c.b16 %v264, %v263
    %v274 = vpack.c.b16 %v266, %v265
    %283 = vmatpush.bf16.msra.mxu0 %v274
    %284 = vmatpush.bf16.msra.mxu0 %v273
    %285 = vmatpush.bf16.msra.mxu0 %v272
    %286 = vmatpush.bf16.msra.mxu0 %v271
    %287 = vmatpush.bf16.msra.mxu0 %v270
    %288 = vmatpush.bf16.msra.mxu0 %v269
    %289 = vmatpush.bf16.msra.mxu0 %v268
    %290 = vmatpush.bf16.msra.mxu0 %v267
    %291 = vmatmul.bf16.gmra.mxu0 %v214
    %v292 = vpop.f32.mrf.mxu0
    %v293 = vadd.f32 %v233, %v292
    %v294 = vpop.f32.mrf.mxu0
    %295 = vdwg.mxu0
    %v296 = vtanh.pop %v293
    %v297 = vpack.c.bf16 %v296, %v296
    %v298 = vld [vmem:[#allocation4] sm:$0xff]
    %v299 = vld [vmem:[#allocation4 + $0x8] sm:$0xff]
    %v300 = vld [vmem:[#allocation4 + $0x10] sm:$0xff]
    %v301 = vld [vmem:[#allocation4 + $0x18] sm:$0xff]
    %v302 = vld [vmem:[#allocation4 + $0x20] sm:$0xff]
    %v303 = vld [vmem:[#allocation4 + $0x28] sm:$0xff]
    %v304 = vld [vmem:[#allocation4 + $0x30] sm:$0xff]
    %v305 = vld [vmem:[#allocation4 + $0x38] sm:$0xff]
    %v306 = vld [vmem:[#allocation4 + $0x40] sm:$0xff]
    %v307 = vld [vmem:[#allocation4 + $0x48] sm:$0xff]
    %v308 = vld [vmem:[#allocation4 + $0x50] sm:$0xff]
    %v309 = vld [vmem:[#allocation4 + $0x58] sm:$0xff]
    %v310 = vld [vmem:[#allocation4 + $0x60] sm:$0xff]
    %v311 = vld [vmem:[#allocation4 + $0x68] sm:$0xff]
    %v312 = vld [vmem:[#allocation4 + $0x70] sm:$0xff]
    %v313 = vld [vmem:[#allocation4 + $0x78] sm:$0xff]
    %v314 = vld [vmem:[%s6] sm:$0x3]
    %v316 = vperm.slane %v314, 0
    %v317 = vperm.slane %v314, 1
    %v336 = vunpack.c.l.b16 %v298
    %v337 = vunpack.c.h.b16 %v298
    %v338 = vunpack.c.l.b16 %v299
    %v339 = vunpack.c.h.b16 %v299
    %v340 = vunpack.c.l.b16 %v300
    %v341 = vunpack.c.h.b16 %v300
    %v342 = vunpack.c.l.b16 %v301
    %v343 = vunpack.c.h.b16 %v301
    %v344 = vunpack.c.l.b16 %v302
    %v345 = vunpack.c.h.b16 %v302
    %v346 = vunpack.c.l.b16 %v303
    %v347 = vunpack.c.h.b16 %v303
    %v348 = vunpack.c.l.b16 %v304
    %v349 = vunpack.c.h.b16 %v304
    %v350 = vunpack.c.l.b16 %v305
    %v351 = vunpack.c.h.b16 %v305
    %v352 = vunpack.c.l.b16 %v306
    %v353 = vunpack.c.h.b16 %v306
    %v354 = vunpack.c.l.b16 %v307
    %v355 = vunpack.c.h.b16 %v307
    %v356 = vunpack.c.l.b16 %v308
    %v357 = vunpack.c.h.b16 %v308
    %v358 = vunpack.c.l.b16 %v309
    %v359 = vunpack.c.h.b16 %v309
    %v360 = vunpack.c.l.b16 %v310
    %v361 = vunpack.c.h.b16 %v310
    %v362 = vunpack.c.l.b16 %v311
    %v363 = vunpack.c.h.b16 %v311
    %v364 = vunpack.c.l.b16 %v312
    %v365 = vunpack.c.h.b16 %v312
    %v366 = vunpack.c.l.b16 %v313
    %v367 = vunpack.c.h.b16 %v313
    %v368 = vpack.c.b16 %v338, %v336
    %v369 = vpack.c.b16 %v339, %v337
    %v370 = vpack.c.b16 %v342, %v340
    %v371 = vpack.c.b16 %v343, %v341
    %v372 = vpack.c.b16 %v346, %v344
    %v373 = vpack.c.b16 %v347, %v345
    %v374 = vpack.c.b16 %v350, %v348
    %v375 = vpack.c.b16 %v351, %v349
    %v376 = vpack.c.b16 %v354, %v352
    %v377 = vpack.c.b16 %v355, %v353
    %v378 = vpack.c.b16 %v358, %v356
    %v379 = vpack.c.b16 %v359, %v357
    %v380 = vpack.c.b16 %v362, %v360
    %v381 = vpack.c.b16 %v363, %v361
    %v382 = vpack.c.b16 %v366, %v364
    %v383 = vpack.c.b16 %v367, %v365
    %400 = vmatpush.bf16.msra.mxu0 %v382
    %401 = vmatpush.bf16.msra.mxu0 %v380
    %402 = vmatpush.bf16.msra.mxu0 %v378
    %403 = vmatpush.bf16.msra.mxu0 %v376
    %404 = vmatpush.bf16.msra.mxu0 %v374
    %405 = vmatpush.bf16.msra.mxu0 %v372
    %406 = vmatpush.bf16.msra.mxu0 %v370
    %407 = vmatpush.bf16.msra.mxu0 %v368
    %408 = vmatmul.bf16.gmra.mxu0 %v297
    %v409 = vpop.f32.mrf.mxu0
    %v410 = vadd.f32 %v316, %v409
    %v411 = vpop.f32.mrf.mxu0
    %412 = vdwg.mxu0
    %413 = vmatpush.bf16.msra.mxu0 %v383
    %414 = vmatpush.bf16.msra.mxu0 %v381
    %415 = vmatpush.bf16.msra.mxu0 %v379
    %416 = vmatpush.bf16.msra.mxu0 %v377
    %417 = vmatpush.bf16.msra.mxu0 %v375
    %418 = vmatpush.bf16.msra.mxu0 %v373
    %419 = vmatpush.bf16.msra.mxu0 %v371
    %420 = vmatpush.bf16.msra.mxu0 %v369
    %421 = vmatmul.bf16.gmra.mxu0 %v297
    %v422 = vpop.f32.mrf.mxu0
    %v423 = vadd.f32 %v317, %v422
    %v424 = vpop.f32.mrf.mxu0
    %425 = vdwg.mxu0
    %426 = vst [vmem:[%s16] sm:$0xff] %v410
    %427 = vst [vmem:[%s16 + $0x8] sm:$0xff] %v423
    %v428 = vld [vmem:[%s7] sm:$0xff]
    %v429 = vmul.f32 %v423, 0.5
    %v430 = vmul.f32 %v429, 1.442695
    %v431 = vpow.pop %v430
    %v432 = vmul.f32 %v428, %v431
    %v433 = vadd.f32 %v410, %v432
    %v434 = vld [vmem:[%s8] sm:$0xff]
    %v435 = vadd.f32 %v433, %v434
    %v436 = vpack.c.bf16 %v435, %v435
    %v437 = vld [vmem:[#allocation6] sm:$0xf]
    %v438 = vld [vmem:[#allocation6 + $0x4] sm:$0xf]
    %v439 = vld [vmem:[#allocation6 + $0x8] sm:$0xf]
    %v440 = vld [vmem:[#allocation6 + $0xc] sm:$0xf]
    %v441 = vld [vmem:[#allocation6 + $0x10] sm:$0xf]
    %v442 = vld [vmem:[#allocation6 + $0x14] sm:$0xf]
    %v443 = vld [vmem:[#allocation6 + $0x18] sm:$0xf]
    %v444 = vld [vmem:[#allocation6 + $0x1c] sm:$0xf]
    %v445 = vld [vmem:[#allocation6 + $0x20] sm:$0xf]
    %v446 = vld [vmem:[#allocation6 + $0x24] sm:$0xf]
    %v447 = vld [vmem:[#allocation6 + $0x28] sm:$0xf]
    %v448 = vld [vmem:[#allocation6 + $0x2c] sm:$0xf]
    %v449 = vld [vmem:[#allocation6 + $0x30] sm:$0xf]
    %v450 = vld [vmem:[#allocation6 + $0x34] sm:$0xf]
    %v451 = vld [vmem:[#allocation6 + $0x38] sm:$0xf]
    %v452 = vld [vmem:[#allocation6 + $0x3c] sm:$0xf]
    %v453 = vld [vmem:[%s10] sm:$0x1]
    %v455 = vperm.slane %v453, 0
    %v473 = vunpack.c.l.b16 %v437
    %v474 = vunpack.c.l.b16 %v438
    %v475 = vunpack.c.l.b16 %v439
    %v476 = vunpack.c.l.b16 %v440
    %v477 = vunpack.c.l.b16 %v441
    %v478 = vunpack.c.l.b16 %v442
    %v479 = vunpack.c.l.b16 %v443
    %v480 = vunpack.c.l.b16 %v444
    %v481 = vunpack.c.l.b16 %v445
    %v482 = vunpack.c.l.b16 %v446
    %v483 = vunpack.c.l.b16 %v447
    %v484 = vunpack.c.l.b16 %v448
    %v485 = vunpack.c.l.b16 %v449
    %v486 = vunpack.c.l.b16 %v450
    %v487 = vunpack.c.l.b16 %v451
    %v488 = vunpack.c.l.b16 %v452
    %v489 = vpack.c.b16 %v474, %v473
    %v490 = vpack.c.b16 %v476, %v475
    %v491 = vpack.c.b16 %v478, %v477
    %v492 = vpack.c.b16 %v480, %v479
    %v493 = vpack.c.b16 %v482, %v481
    %v494 = vpack.c.b16 %v484, %v483
    %v495 = vpack.c.b16 %v486, %v485
    %v496 = vpack.c.b16 %v488, %v487
    %505 = vmatpush.bf16.msra.mxu0 %v496
    %506 = vmatpush.bf16.msra.mxu0 %v495
    %507 = vmatpush.bf16.msra.mxu0 %v494
    %508 = vmatpush.bf16.msra.mxu0 %v493
    %509 = vmatpush.bf16.msra.mxu0 %v492
    %510 = vmatpush.bf16.msra.mxu0 %v491
    %511 = vmatpush.bf16.msra.mxu0 %v490
    %512 = vmatpush.bf16.msra.mxu0 %v489
    %513 = vmatmul.bf16.gmra.mxu0 %v436
    %v514 = vpop.f32.mrf.mxu0
    %v515 = vadd.f32 %v455, %v514
    %v516 = vpop.f32.mrf.mxu0
    %517 = vdwg.mxu0
    %v518 = vtanh.pop %v515
    %v519 = vpack.c.bf16 %v518, %v518
    %v520 = vld [vmem:[#allocation7] sm:$0xf]
    %v521 = vld [vmem:[#allocation7 + $0x4] sm:$0xf]
    %v522 = vld [vmem:[#allocation7 + $0x8] sm:$0xf]
    %v523 = vld [vmem:[#allocation7 + $0xc] sm:$0xf]
    %v524 = vld [vmem:[#allocation7 + $0x10] sm:$0xf]
    %v525 = vld [vmem:[#allocation7 + $0x14] sm:$0xf]
    %v526 = vld [vmem:[#allocation7 + $0x18] sm:$0xf]
    %v527 = vld [vmem:[#allocation7 + $0x1c] sm:$0xf]
    %v528 = vld [vmem:[#allocation7 + $0x20] sm:$0xf]
    %v529 = vld [vmem:[#allocation7 + $0x24] sm:$0xf]
    %v530 = vld [vmem:[#allocation7 + $0x28] sm:$0xf]
    %v531 = vld [vmem:[#allocation7 + $0x2c] sm:$0xf]
    %v532 = vld [vmem:[#allocation7 + $0x30] sm:$0xf]
    %v533 = vld [vmem:[#allocation7 + $0x34] sm:$0xf]
    %v534 = vld [vmem:[#allocation7 + $0x38] sm:$0xf]
    %v535 = vld [vmem:[#allocation7 + $0x3c] sm:$0xf]
    %v536 = vld [vmem:[%s12] sm:$0x1]
    %v538 = vperm.slane %v536, 0
    %v556 = vunpack.c.l.b16 %v520
    %v557 = vunpack.c.l.b16 %v521
    %v558 = vunpack.c.l.b16 %v522
    %v559 = vunpack.c.l.b16 %v523
    %v560 = vunpack.c.l.b16 %v524
    %v561 = vunpack.c.l.b16 %v525
    %v562 = vunpack.c.l.b16 %v526
    %v563 = vunpack.c.l.b16 %v527
    %v564 = vunpack.c.l.b16 %v528
    %v565 = vunpack.c.l.b16 %v529
    %v566 = vunpack.c.l.b16 %v530
    %v567 = vunpack.c.l.b16 %v531
    %v568 = vunpack.c.l.b16 %v532
    %v569 = vunpack.c.l.b16 %v533
    %v570 = vunpack.c.l.b16 %v534
    %v571 = vunpack.c.l.b16 %v535
    %v572 = vpack.c.b16 %v557, %v556
    %v573 = vpack.c.b16 %v559, %v558
    %v574 = vpack.c.b16 %v561, %v560
    %v575 = vpack.c.b16 %v563, %v562
    %v576 = vpack.c.b16 %v565, %v564
    %v577 = vpack.c.b16 %v567, %v566
    %v578 = vpack.c.b16 %v569, %v568
    %v579 = vpack.c.b16 %v571, %v570
    %588 = vmatpush.bf16.msra.mxu0 %v579
    %589 = vmatpush.bf16.msra.mxu0 %v578
    %590 = vmatpush.bf16.msra.mxu0 %v577
    %591 = vmatpush.bf16.msra.mxu0 %v576
    %592 = vmatpush.bf16.msra.mxu0 %v575
    %593 = vmatpush.bf16.msra.mxu0 %v574
    %594 = vmatpush.bf16.msra.mxu0 %v573
    %595 = vmatpush.bf16.msra.mxu0 %v572
    %596 = vmatmul.bf16.gmra.mxu0 %v519
    %v597 = vpop.f32.mrf.mxu0
    %v598 = vadd.f32 %v538, %v597
    %v599 = vpop.f32.mrf.mxu0
    %600 = vdwg.mxu0
    %v601 = vtanh.pop %v598
    %v602 = vpack.c.bf16 %v601, %v601
    %v603 = vld [vmem:[#allocation9] sm:$0xff]
    %v604 = vld [vmem:[#allocation9 + $0x8] sm:$0xf]
    %v605 = vld [vmem:[#allocation9 + $0xc] sm:$0xff]
    %v606 = vld [vmem:[#allocation9 + $0x14] sm:$0xf]
    %v607 = vld [vmem:[#allocation9 + $0x18] sm:$0xff]
    %v608 = vld [vmem:[#allocation9 + $0x20] sm:$0xf]
    %v609 = vld [vmem:[#allocation9 + $0x24] sm:$0xff]
    %v610 = vld [vmem:[#allocation9 + $0x2c] sm:$0xf]
    %v611 = vld [vmem:[#allocation9 + $0x30] sm:$0xff]
    %v612 = vld [vmem:[#allocation9 + $0x38] sm:$0xf]
    %v613 = vld [vmem:[#allocation9 + $0x3c] sm:$0xff]
    %v614 = vld [vmem:[#allocation9 + $0x44] sm:$0xf]
    %v615 = vld [vmem:[#allocation9 + $0x48] sm:$0xff]
    %v616 = vld [vmem:[#allocation9 + $0x50] sm:$0xf]
    %v617 = vld [vmem:[#allocation9 + $0x54] sm:$0xff]
    %v618 = vld [vmem:[#allocation9 + $0x5c] sm:$0xf]
    %v619 = vld [vmem:[#allocation9 + $0x60] sm:$0xff]
    %v620 = vld [vmem:[#allocation9 + $0x68] sm:$0xf]
    %v621 = vld [vmem:[#allocation9 + $0x6c] sm:$0xff]
    %v622 = vld [vmem:[#allocation9 + $0x74] sm:$0xf]
    %v623 = vld [vmem:[#allocation9 + $0x78] sm:$0xff]
    %v624 = vld [vmem:[#allocation9 + $0x80] sm:$0xf]
    %v625 = vld [vmem:[#allocation9 + $0x84] sm:$0xff]
    %v626 = vld [vmem:[#allocation9 + $0x8c] sm:$0xf]
    %v627 = vld [vmem:[#allocation9 + $0x90] sm:$0xff]
    %v628 = vld [vmem:[#allocation9 + $0x98] sm:$0xf]
    %v629 = vld [vmem:[#allocation9 + $0x9c] sm:$0xff]
    %v630 = vld [vmem:[#allocation9 + $0xa4] sm:$0xf]
    %v631 = vld [vmem:[#allocation9 + $0xa8] sm:$0xff]
    %v632 = vld [vmem:[#allocation9 + $0xb0] sm:$0xf]
    %v633 = vld [vmem:[#allocation9 + $0xb4] sm:$0xff]
    %v634 = vld [vmem:[#allocation9 + $0xbc] sm:$0xf]
    %v635 = vld [vmem:[%s14] sm:$0x7]
    %v637 = vperm.slane %v635, 0
    %v638 = vperm.slane %v635, 1
    %v639 = vperm.slane %v635, 2
    %v675 = vunpack.c.l.b16 %v603
    %v676 = vunpack.c.h.b16 %v603
    %v677 = vunpack.c.l.b16 %v604
    %v678 = vunpack.c.l.b16 %v605
    %v679 = vunpack.c.h.b16 %v605
    %v680 = vunpack.c.l.b16 %v606
    %v681 = vunpack.c.l.b16 %v607
    %v682 = vunpack.c.h.b16 %v607
    %v683 = vunpack.c.l.b16 %v608
    %v684 = vunpack.c.l.b16 %v609
    %v685 = vunpack.c.h.b16 %v609
    %v686 = vunpack.c.l.b16 %v610
    %v687 = vunpack.c.l.b16 %v611
    %v688 = vunpack.c.h.b16 %v611
    %v689 = vunpack.c.l.b16 %v612
    %v690 = vunpack.c.l.b16 %v613
    %v691 = vunpack.c.h.b16 %v613
    %v692 = vunpack.c.l.b16 %v614
    %v693 = vunpack.c.l.b16 %v615
    %v694 = vunpack.c.h.b16 %v615
    %v695 = vunpack.c.l.b16 %v616
    %v696 = vunpack.c.l.b16 %v617
    %v697 = vunpack.c.h.b16 %v617
    %v698 = vunpack.c.l.b16 %v618
    %v699 = vunpack.c.l.b16 %v619
    %v700 = vunpack.c.h.b16 %v619
    %v701 = vunpack.c.l.b16 %v620
    %v702 = vunpack.c.l.b16 %v621
    %v703 = vunpack.c.h.b16 %v621
    %v704 = vunpack.c.l.b16 %v622
    %v705 = vunpack.c.l.b16 %v623
    %v706 = vunpack.c.h.b16 %v623
    %v707 = vunpack.c.l.b16 %v624
    %v708 = vunpack.c.l.b16 %v625
    %v709 = vunpack.c.h.b16 %v625
    %v710 = vunpack.c.l.b16 %v626
    %v711 = vunpack.c.l.b16 %v627
    %v712 = vunpack.c.h.b16 %v627
    %v713 = vunpack.c.l.b16 %v628
    %v714 = vunpack.c.l.b16 %v629
    %v715 = vunpack.c.h.b16 %v629
    %v716 = vunpack.c.l.b16 %v630
    %v717 = vunpack.c.l.b16 %v631
    %v718 = vunpack.c.h.b16 %v631
    %v719 = vunpack.c.l.b16 %v632
    %v720 = vunpack.c.l.b16 %v633
    %v721 = vunpack.c.h.b16 %v633
    %v722 = vunpack.c.l.b16 %v634
    %v723 = vpack.c.b16 %v678, %v675
    %v724 = vpack.c.b16 %v679, %v676
    %v725 = vpack.c.b16 %v680, %v677
    %v726 = vpack.c.b16 %v684, %v681
    %v727 = vpack.c.b16 %v685, %v682
    %v728 = vpack.c.b16 %v686, %v683
    %v729 = vpack.c.b16 %v690, %v687
    %v730 = vpack.c.b16 %v691, %v688
    %v731 = vpack.c.b16 %v692, %v689
    %v732 = vpack.c.b16 %v696, %v693
    %v733 = vpack.c.b16 %v697, %v694
    %v734 = vpack.c.b16 %v698, %v695
    %v735 = vpack.c.b16 %v702, %v699
    %v736 = vpack.c.b16 %v703, %v700
    %v737 = vpack.c.b16 %v704, %v701
    %v738 = vpack.c.b16 %v708, %v705
    %v739 = vpack.c.b16 %v709, %v706
    %v740 = vpack.c.b16 %v710, %v707
    %v741 = vpack.c.b16 %v714, %v711
    %v742 = vpack.c.b16 %v715, %v712
    %v743 = vpack.c.b16 %v716, %v713
    %v744 = vpack.c.b16 %v720, %v717
    %v745 = vpack.c.b16 %v721, %v718
    %v746 = vpack.c.b16 %v722, %v719
    %771 = vmatpush.bf16.msra.mxu0 %v744
    %772 = vmatpush.bf16.msra.mxu0 %v741
    %773 = vmatpush.bf16.msra.mxu0 %v738
    %774 = vmatpush.bf16.msra.mxu0 %v735
    %775 = vmatpush.bf16.msra.mxu0 %v732
    %776 = vmatpush.bf16.msra.mxu0 %v729
    %777 = vmatpush.bf16.msra.mxu0 %v726
    %778 = vmatpush.bf16.msra.mxu0 %v723
    %779 = vmatmul.bf16.gmra.mxu0 %v602
    %v780 = vpop.f32.mrf.mxu0
    %v781 = vadd.f32 %v637, %v780
    %v782 = vpop.f32.mrf.mxu0
    %783 = vdwg.mxu0
    %784 = vmatpush.bf16.msra.mxu0 %v745
    %785 = vmatpush.bf16.msra.mxu0 %v742
    %786 = vmatpush.bf16.msra.mxu0 %v739
    %787 = vmatpush.bf16.msra.mxu0 %v736
    %788 = vmatpush.bf16.msra.mxu0 %v733
    %789 = vmatpush.bf16.msra.mxu0 %v730
    %790 = vmatpush.bf16.msra.mxu0 %v727
    %791 = vmatpush.bf16.msra.mxu0 %v724
    %792 = vmatmul.bf16.gmra.mxu0 %v602
    %v793 = vpop.f32.mrf.mxu0
    %v794 = vadd.f32 %v638, %v793
    %v795 = vpop.f32.mrf.mxu0
    %796 = vdwg.mxu0
    %797 = vmatpush.bf16.msra.mxu0 %v746
    %798 = vmatpush.bf16.msra.mxu0 %v743
    %799 = vmatpush.bf16.msra.mxu0 %v740
    %800 = vmatpush.bf16.msra.mxu0 %v737
    %801 = vmatpush.bf16.msra.mxu0 %v734
    %802 = vmatpush.bf16.msra.mxu0 %v731
    %803 = vmatpush.bf16.msra.mxu0 %v728
    %804 = vmatpush.bf16.msra.mxu0 %v725
    %805 = vmatmul.bf16.gmra.mxu0 %v602
    %v806 = vpop.f32.mrf.mxu0
    %v807 = vadd.f32 %v639, %v806
    %v808 = vpop.f32.mrf.mxu0
    %809 = vdwg.mxu0
    %810 = vst [vmem:[%s15] sm:$0xff] %v781
    %811 = vst [vmem:[%s15 + $0x8] sm:$0xff] %v794
    %v812 = vsub.f32 0.0, %v807
    %v813 = vmul.f32 %v812, 1.442695
    %v814 = vpow.pop %v813
    %v815 = vadd.f32 %v814, 1.0
    %v816 = vrcp.pop %v815
    %817 = vst [vmem:[%s15 + $0x10] sm:$0xff] %v816
    // Predicated region
    $region82: #{multi_vae_forward.1} parent=1 // pred_check
      _
    $region83: #{multi_vae_forward.1} parent=1 // pred_check_branch
      %819 = sbr.rel (0) target = $region85
    $region84: #{multi_vae_forward.1} parent=1 // pred_region
      _
    $region85: #{multi_vae_forward.1} parent=1 // pred_fallthru
      _
    // Predicated region
    $region86: #{multi_vae_forward.1} parent=1 // pred_check
      _
    $region87: #{multi_vae_forward.1} parent=1 // pred_check_branch
      %821 = sbr.rel (0) target = $region89
    $region88: #{multi_vae_forward.1} parent=1 // pred_region
      _
    $region89: #{multi_vae_forward.1} parent=1 // pred_fallthru
      _
    // Predicated region
    $region90: #{multi_vae_forward.1} parent=1 // pred_check
      _
    $region91: #{multi_vae_forward.1} parent=1 // pred_check_branch
      %823 = sbr.rel (0) target = $region93
    $region92: #{multi_vae_forward.1} parent=1 // pred_region
      _
    $region93: #{multi_vae_forward.1} parent=1 // pred_fallthru
      _
    // Predicated region
    $region94: #{multi_vae_forward.1} parent=1 // pred_check
      _
    $region95: #{multi_vae_forward.1} parent=1 // pred_check_branch
      %825 = sbr.rel (0) target = $region97
    $region96: #{multi_vae_forward.1} parent=1 // pred_region
      _
    $region97: #{multi_vae_forward.1} parent=1 // pred_fallthru
      _
    %826 = vsyncpa [#allocation3], 1
    %827 = vsyncpa [#allocation5], 1
    %828 = vsyncpa [#allocation8], 1

</llo_original>
